<compile_context>
chip_gen: v7x
topology: tpu7x:2x2x1
jax: 0.10.0
libtpu: 0.0.40
codegen_flags: <defaults>
</compile_context>

<pallas_src>
import functools

import jax
import jax.numpy as jnp
from jax import lax
from jax.experimental import pallas as pl
from jax.experimental.pallas import tpu as pltpu


def _adder_kernel(x_ref, o_ref, *, num_out, scale):
    """x_ref: (TM, num_out*TLo) in native dtype; o_ref: (TM, TLo)."""
    tl = x_ref.shape[-1]
    tlo = o_ref.shape[-1]
    # Banded pooling matrix: P[i, j] = scale iff j*num_out <= i < (j+1)*num_out.
    rows = lax.broadcasted_iota(jnp.int32, (tl, tlo), 0)
    cols = lax.broadcasted_iota(jnp.int32, (tl, tlo), 1)
    band = (rows >= cols * num_out) & (rows < (cols + 1) * num_out)
    # scale = N / num_out folded in once (exact in f32; exact in bf16 too for
    # power-of-two num_out and moderate N).
    pool = jnp.where(band, jnp.float32(scale), jnp.float32(0.0)).astype(x_ref.dtype)
    o_ref[...] = jnp.dot(
        x_ref[...], pool, preferred_element_type=jnp.float32
    ).astype(o_ref.dtype)


@functools.partial(jax.jit, static_argnames=("num_out", "row_tile"))
def adder_forward(x, num_out=2, *, row_tile=512):
    """x: (N, C, L) -> N * avg_pool1d(x, num_out) (kernel_size = stride = num_out)."""
    N, C, L = x.shape
    assert L % num_out == 0, "length must be divisible by pool kernel size"
    L_out = L // num_out
    M = N * C

    # Lane tile: 128 wide (lane-dense stores, full MXU column width on v5e)
    # whenever L_out allows; otherwise fall back to the full output width.
    TLo = 128 if L_out % 128 == 0 else L_out
    TL = TLo * num_out
    TM = min(row_tile, M)

    x2d = x.reshape(M, L)  # contiguous reshape -> free; dtype kept native.

    out2d = pl.pallas_call(
        functools.partial(
            _adder_kernel, num_out=num_out, scale=float(N) / float(num_out)
        ),
        out_shape=jax.ShapeDtypeStruct((M, L_out), x.dtype),
        grid=(pl.cdiv(M, TM), L_out // TLo),
        in_specs=[pl.BlockSpec((TM, TL), lambda i, j: (i, j))],
        out_specs=pl.BlockSpec((TM, TLo), lambda i, j: (i, j)),
        compiler_params=pltpu.CompilerParams(
            dimension_semantics=("parallel", "parallel")
        ),
    )(x2d)

    return out2d.reshape(N, C, L_out)


def _reference(x, num_out=2):
    N, C, L = x.shape
    pooled = x.reshape(N, C, L // num_out, num_out).mean(axis=-1)
    return N * pooled


if __name__ == "__main__":
    key = jax.random.PRNGKey(0)
    N, C, L = 2, 4, 16          # small shapes consistent with avg_pool1d (NCL)
    num_out = 2

    x = jax.random.normal(key, (N, C, L), dtype=jnp.float32)

    out = adder_forward(x, num_out=num_out)
    out = jax.block_until_ready(out)

    ref = _reference(x, num_out=num_out)
    assert out.shape == (N, C, L // num_out)
    assert jnp.allclose(out, ref, atol=1e-5, rtol=1e-5)

    print("KERNEL_OK")
</pallas_src>

<mosaic_0001>
module attributes {stable_mosaic.version = 11 : i64} {
  func.func @_adder_kernel(%arg0: i32, %arg1: i32, %arg2: memref<8x16xf32, #tpu.memory_space<vmem>>, %arg3: memref<8x8xf32, #tpu.memory_space<vmem>>) attributes {dimension_semantics = [#tpu.dimension_semantics<parallel>, #tpu.dimension_semantics<parallel>], iteration_bounds = array<i64: 1, 1>, scalar_prefetch = 0 : i64, scratch_operands = 0 : i64, tpu.core_type = #tpu.core_type<tc>, window_params = [{transform_indices = @transform_0, window_bounds = array<i64: 8, 16>}, {transform_indices = @transform_1, window_bounds = array<i64: 8, 8>}]} {
    %0 = tpu.iota {dimensions = array<i32: 0>} : vector<16x8xi32>
    %1 = tpu.iota {dimensions = array<i32: 1>} : vector<16x8xi32>
    %c2_i32 = arith.constant 2 : i32
    %2 = vector.broadcast %c2_i32 : i32 to vector<16x8xi32>
    %3 = arith.muli %1, %2 : vector<16x8xi32>
    %4 = arith.cmpi sge, %0, %3 : vector<16x8xi32>
    %c1_i32 = arith.constant 1 : i32
    %5 = vector.broadcast %c1_i32 : i32 to vector<16x8xi32>
    %6 = arith.addi %1, %5 : vector<16x8xi32>
    %c2_i32_0 = arith.constant 2 : i32
    %7 = vector.broadcast %c2_i32_0 : i32 to vector<16x8xi32>
    %8 = arith.muli %6, %7 : vector<16x8xi32>
    %9 = arith.cmpi slt, %0, %8 : vector<16x8xi32>
    %10 = arith.andi %4, %9 : vector<16x8xi1>
    %cst = arith.constant 1.000000e+00 : f32
    %cst_1 = arith.constant 0.000000e+00 : f32
    %11 = vector.broadcast %cst : f32 to vector<16x8xf32>
    %12 = vector.broadcast %cst_1 : f32 to vector<16x8xf32>
    %13 = arith.select %10, %11, %12 : vector<16x8xi1>, vector<16x8xf32>
    %c0 = arith.constant 0 : index
    %c0_2 = arith.constant 0 : index
    %14 = vector.load %arg2[%c0, %c0_2] : memref<8x16xf32, #tpu.memory_space<vmem>>, vector<8x16xf32>
    %cst_3 = arith.constant dense<0.000000e+00> : vector<8x8xf32>
    %15 = tpu.matmul %14, %13, %cst_3 {dimension_numbers = #tpu.dot_dimension_numbers<[1], [0], [0], [1], [0, 0, 1, 1], [], []>} : vector<8x16xf32>, vector<16x8xf32>, vector<8x8xf32> -> vector<8x8xf32>
    %c0_4 = arith.constant 0 : index
    %c0_5 = arith.constant 0 : index
    %16 = vector.load %arg3[%c0_4, %c0_5] : memref<8x8xf32, #tpu.memory_space<vmem>>, vector<8x8xf32>
    tpu.vector_store %arg3[%c0_4, %c0_5], %15 {strides = array<i32>} : memref<8x8xf32, #tpu.memory_space<vmem>>, vector<8x8xf32>,
    return
  }
  func.func @transform_0(%arg0: i32, %arg1: i32) -> (i32, i32) {
    %c0_i32 = arith.constant 0 : i32
    return %arg0, %arg1 : i32, i32
  }
  func.func @transform_1(%arg0: i32, %arg1: i32) -> (i32, i32) {
    %c0_i32 = arith.constant 0 : i32
    return %arg0, %arg1 : i32, i32
  }
}

</mosaic_0001>

<llo_original>
// kernel: adder_forward.1
$region0: #{adder_forward.1}
  #allocation0 [shape = 'u32[]', space=smem, size = 0x4, offset = 0x4, fixed_abs, tag = 'smem constant byte address 0x4 - core index']
  #allocation1 [shape = 'u32[144,128]{1,0:T(1,128)}', space=vmem, size = 0x12000, scoped, tag = 'internal scratch']
  %s0 = inlined_call_operand.hbm [shape: f32[8,16], index: 0, kind: input, shape index: {}]
  %s1 = inlined_call_operand.hbm [shape: f32[8,8], index: 1, kind: output, shape index: {}]
  %s2 = sld [smem:[#allocation0]]
  $region18: #{adder_forward.1} parent=0
    _
  %s4 = ssub.s32 1, %s2
  %s5 = scalar_select 0, %s4, %s2
  $region1: #{adder_forward.1} parent=0
    #allocation2 [shape = 'u8[4096]{0}', space=vmem, size = 0x1000, scoped, tag = 'input window, operand 0, single buffered']
    #allocation3 [shape = 's32[1]{0}', space=sflag, size = 0x4, scoped, tag = 'scoped memory for adder_forward.1']
    #allocation4 [shape = 's32[1]{0}', space=sflag, size = 0x4, scoped, tag = 'scoped memory for adder_forward.1']
    #allocation5 [shape = 'u8[4096]{0}', space=vmem, size = 0x1000, scoped, tag = 'output window, operand 0, single buffered']
    %6 = vsyncpa [#allocation3], 0
    %7 = vsyncpa [#allocation4], 0
    // Predicated region
    $region2: #{adder_forward.1} parent=1 // pred_check
      _
    $region3: #{adder_forward.1} parent=1 // pred_check_branch
      %9 = sbr.rel (0) target = $region5
    $region4: #{adder_forward.1} parent=1 // pred_region
      %s11 = ssub.s32 128, 128
      %12 = vsyncadd [#allocation3], %s11
      %s14 = sshll.u32 [#allocation2], 4
      %s15 = int_to_ptr.vmem [resolvable:$true] %s14
      %17 = dma.hbm_to_vmem [thread:$0]  %s0, 128, %s15, [#allocation3]
    $region5: #{adder_forward.1} parent=1 // pred_fallthru
      _
    // Predicated region
    $region6: #{adder_forward.1} parent=1 // pred_check
      _
    $region7: #{adder_forward.1} parent=1 // pred_check_branch
      %19 = sbr.rel (0) target = $region9
    $region8: #{adder_forward.1} parent=1 // pred_region
      %20 = dma.done [#allocation3], 128
    $region9: #{adder_forward.1} parent=1 // pred_fallthru
      _
    %v21 = vlaneseq
    %v22 = vshrl.u32 %v21, 7
    %v23 = vadd.s32 %v22, 8
    %v24 = vlaneseq
    %v25 = vand.u32 %v24, 127
    %v26 = vmul.u32 %v25, 2
    %vm27 = vcmp.ge.s32.totalorder %v22, %v26
    %vm28 = vcmp.ge.s32.totalorder %v23, %v26
    %v29 = vadd.s32 %v25, 1
    %v30 = vmul.u32 %v29, 2
    %vm31 = vcmp.lt.s32.totalorder %v22, %v30
    %vm32 = vcmp.lt.s32.totalorder %v23, %v30
    %vm33 = vmand %vm27, %vm31
    %vm34 = vmand %vm28, %vm32
    %v35 = vsel %vm33, 1.0, 0.0
    %v36 = vsel %vm34, 1.0, 0.0
    %v37 = vld [vmem:[#allocation2] sm:$0xff]
    %vm38 = vcmask 130048
    %v40 = vsel %vm38, %v37, 0
    %42 = vmatprep.subr.mxu0 0.0
    %43 = vmatpush1.msra.mxu0 %v35
    %44 = vmatprep.subr.mxu0 0.0
    %45 = vmatpush1.msra.mxu0 %v36
    %46 = vmatprep.subr.mxu0 0.0
    %47 = vmatpush1.msra.mxu0 0.0
    %48 = vmatprep.subr.mxu0 0.0
    %49 = vmatpush1.msra.mxu0 0.0
    %50 = vmatprep.subr.mxu0 0.0
    %51 = vmatpush1.msra.mxu0 0.0
    %52 = vmatprep.subr.mxu0 0.0
    %53 = vmatpush1.msra.mxu0 0.0
    %54 = vmatprep.subr.mxu0 0.0
    %55 = vmatpush1.msra.mxu0 0.0
    %56 = vmatprep.subr.mxu0 0.0
    %57 = vmatpush1.msra.mxu0 0.0
    %58 = vmatprep.subr.mxu0 0.0
    %59 = vmatpush1.msra.mxu0 0.0
    %60 = vmatprep.subr.mxu0 0.0
    %61 = vmatpush1.msra.mxu0 0.0
    %62 = vmatprep.subr.mxu0 0.0
    %63 = vmatpush1.msra.mxu0 0.0
    %64 = vmatprep.subr.mxu0 0.0
    %65 = vmatpush1.msra.mxu0 0.0
    %66 = vmatprep.subr.mxu0 0.0
    %67 = vmatpush1.msra.mxu0 0.0
    %68 = vmatprep.subr.mxu0 0.0
    %69 = vmatpush1.msra.mxu0 0.0
    %70 = vmatprep.subr.mxu0 0.0
    %71 = vmatpush1.msra.mxu0 0.0
    %72 = vmatprep.subr.mxu0 0.0
    %73 = vmatpush1.msra.mxu0 0.0
    %74 = vmatprep.subr.mxu0 0.0
    %75 = vmatpush1.msra.mxu0 0.0
    %76 = vmatprep.subr.mxu0 0.0
    %77 = vmatpush1.msra.mxu0 0.0
    %78 = vmatprep.subr.mxu0 0.0
    %79 = vmatpush1.msra.mxu0 0.0
    %80 = vmatprep.subr.mxu0 0.0
    %81 = vmatpush1.msra.mxu0 0.0
    %82 = vmatprep.subr.mxu0 0.0
    %83 = vmatpush1.msra.mxu0 0.0
    %84 = vmatprep.subr.mxu0 0.0
    %85 = vmatpush1.msra.mxu0 0.0
    %86 = vmatprep.subr.mxu0 0.0
    %87 = vmatpush1.msra.mxu0 0.0
    %88 = vmatprep.subr.mxu0 0.0
    %89 = vmatpush1.msra.mxu0 0.0
    %90 = vmatprep.subr.mxu0 0.0
    %91 = vmatpush1.msra.mxu0 0.0
    %92 = vmatprep.subr.mxu0 0.0
    %93 = vmatpush1.msra.mxu0 0.0
    %94 = vmatprep.subr.mxu0 0.0
    %95 = vmatpush1.msra.mxu0 0.0
    %96 = vmatprep.subr.mxu0 0.0
    %97 = vmatpush1.msra.mxu0 0.0
    %98 = vmatprep.subr.mxu0 0.0
    %99 = vmatpush1.msra.mxu0 0.0
    %100 = vmatprep.subr.mxu0 0.0
    %101 = vmatpush1.msra.mxu0 0.0
    %102 = vmatprep.subr.mxu0 0.0
    %103 = vmatpush1.msra.mxu0 0.0
    %104 = vmatprep.subr.mxu0 0.0
    %105 = vmatpush1.msra.mxu0 0.0
    %106 = vmatprep.mubr.f32.mxu0 0.0
    %107 = vmatmul.mubr.f32.gmra.mrb[0].mxu0 %v40
    %v108 = vpop.f32.mrb[0].mxu0
    %v109 = vadd.f32 0.0, %v108
    %v110 = vpop.f32.mrb[0].mxu0
    %111 = vdwg.mxu0
    %vm112 = vcmask 64512
    %113 = vst.msk [vmem:[#allocation5] sm:$0xff] %vm112, %v109
    // Predicated region
    $region10: #{adder_forward.1} parent=1 // pred_check
      _
    $region11: #{adder_forward.1} parent=1 // pred_check_branch
      %115 = sbr.rel (0) target = $region13
    $region12: #{adder_forward.1} parent=1 // pred_region
      %s117 = ssub.s32 128, 128
      %118 = vsyncadd [#allocation4], %s117
      %s120 = sshll.u32 [#allocation5], 4
      %s121 = int_to_ptr.vmem [resolvable:$true] %s120
      %123 = dma.vmem_to_hbm [thread:$0]  %s121, 128, %s1, [#allocation4]
    $region13: #{adder_forward.1} parent=1 // pred_fallthru
      _
    // Predicated region
    $region14: #{adder_forward.1} parent=1 // pred_check
      _
    $region15: #{adder_forward.1} parent=1 // pred_check_branch
      %125 = sbr.rel (0) target = $region17
    $region16: #{adder_forward.1} parent=1 // pred_region
      %126 = dma.done [#allocation4], 128
    $region17: #{adder_forward.1} parent=1 // pred_fallthru
      _
    %127 = vsyncpa [#allocation3], 1
    %128 = vsyncpa [#allocation4], 1

</llo_original>
